<compile_context>
chip_gen: v5e
topology: v5e:2x2
jax: 0.10.0
libtpu: 0.0.40
codegen_flags: <defaults>
</compile_context>

<pallas_src>
import functools

import jax
import jax.numpy as jnp
from jax import lax
from jax.experimental import pallas as pl
from jax.experimental.pallas import tpu as pltpu


def _resblock_kernel(x_ref, w1_ref, g1_ref, b1_ref, w2_ref, g2_ref, b2_ref,
                     o_ref, *, num_groups):
    """Process one batch sample: x_ref block is (1, C, L)."""
    x = x_ref[0]                      # [C, L] f32
    _, L = x.shape

    # Shift matrices (built once, reused by both convs). 0/1 entries, so the
    # shift matmuls are exact and zero-pad the boundaries automatically.
    r = lax.broadcasted_iota(jnp.int32, (L, L), 0)
    c = lax.broadcasted_iota(jnp.int32, (L, L), 1)
    s_m1 = (r + 1 == c).astype(jnp.float32)   # (x @ s_m1)[:, l] = x[:, l-1]
    s_p1 = (r == c + 1).astype(jnp.float32)   # (x @ s_p1)[:, l] = x[:, l+1]

    def conv_same3(inp, w_cat_ref):
        # inp: [Cin, L] f32 ; w_cat_ref: [Cout, 3*Cin] bf16 (tap-major blocks)
        xm1 = jnp.dot(inp, s_m1, preferred_element_type=jnp.float32)
        xp1 = jnp.dot(inp, s_p1, preferred_element_type=jnp.float32)
        xcat = jnp.concatenate([xm1, inp, xp1], axis=0).astype(jnp.bfloat16)
        # bf16 MXU operands, f32 accumulation.
        return jnp.dot(w_cat_ref[...], xcat, preferred_element_type=jnp.float32)

    def group_norm(y, gamma_ref, beta_ref):
        # y: [Cy, L] f32 ; gamma/beta refs: [Cy, 1] f32
        Cy = y.shape[0]
        Cg = Cy // num_groups
        # Group-membership matrices built from 2-D iotas (no reshapes).
        g_i = lax.broadcasted_iota(jnp.int32, (num_groups, Cy), 0)
        c_i = lax.broadcasted_iota(jnp.int32, (num_groups, Cy), 1)
        M = ((c_i >= g_i * Cg) & (c_i < (g_i + 1) * Cg)).astype(jnp.float32)
        c_t = lax.broadcasted_iota(jnp.int32, (Cy, num_groups), 0)
        g_t = lax.broadcasted_iota(jnp.int32, (Cy, num_groups), 1)
        MT = ((c_t >= g_t * Cg) & (c_t < (g_t + 1) * Cg)).astype(jnp.float32)

        n = jnp.float32(Cg * L)
        gsum = jnp.sum(jnp.dot(M, y, preferred_element_type=jnp.float32),
                       axis=-1, keepdims=True)          # [G, 1]
        gsq = jnp.sum(jnp.dot(M, y * y, preferred_element_type=jnp.float32),
                      axis=-1, keepdims=True)           # [G, 1]
        mean = gsum / n
        var = jnp.maximum(gsq / n - mean * mean, 0.0)
        inv = lax.rsqrt(var + 1e-5)                     # EUP rsqrt
        # Broadcast group stats back to per-channel [Cy, L] via MXU.
        mean_c = jnp.dot(MT, jnp.broadcast_to(mean, (num_groups, L)),
                         preferred_element_type=jnp.float32)
        inv_c = jnp.dot(MT, jnp.broadcast_to(inv, (num_groups, L)),
                        preferred_element_type=jnp.float32)
        return (y - mean_c) * inv_c * gamma_ref[...] + beta_ref[...]

    y = conv_same3(x, w1_ref)          # conv1
    y = jnp.maximum(y, 0.0)            # relu
    y = group_norm(y, g1_ref, b1_ref)  # norm1
    y = conv_same3(y, w2_ref)          # conv2
    y = jnp.maximum(y, 0.0)            # relu
    y = group_norm(y, g2_ref, b2_ref)  # norm2
    o_ref[0] = (y + x).astype(o_ref.dtype)  # residual add


def resblock_forward(x, w1, g1, b1, w2, g2, b2, *, num_groups=8):
    """x: [B, C, L] f32, w1: [Ci, C, 3], w2: [C, Ci, 3], g/b: per-channel."""
    B, C, L = x.shape
    Ci = w1.shape[0]
    assert w1.shape == (Ci, C, 3) and w2.shape == (C, Ci, 3)
    assert C % num_groups == 0 and Ci % num_groups == 0

    # Wrapper-side layout plumbing: tap-major [Cout, 3*Cin] bf16 weights so the
    # conv is a single MXU matmul; per-channel affine params as [C, 1] columns.
    w1_cat = jnp.concatenate([w1[:, :, k] for k in range(3)],
                             axis=1).astype(jnp.bfloat16)      # [Ci, 3*C]
    w2_cat = jnp.concatenate([w2[:, :, k] for k in range(3)],
                             axis=1).astype(jnp.bfloat16)      # [C, 3*Ci]
    g1c = g1.reshape(Ci, 1).astype(jnp.float32)
    b1c = b1.reshape(Ci, 1).astype(jnp.float32)
    g2c = g2.reshape(C, 1).astype(jnp.float32)
    b2c = b2.reshape(C, 1).astype(jnp.float32)

    flops = int(B * (4 * (C + Ci) * L * L          # shift matmuls
                     + 12 * C * Ci * L             # conv matmuls
                     + 8 * num_groups * (C + Ci) * L))  # groupnorm matmuls
    transcendentals = int(B * 2 * num_groups)
    bytes_accessed = int(2 * B * C * L * 4 + 6 * C * Ci * 2 + 2 * (C + Ci) * 4)

    kernel = functools.partial(_resblock_kernel, num_groups=num_groups)

    return pl.pallas_call(
        kernel,
        out_shape=jax.ShapeDtypeStruct((B, C, L), x.dtype),
        grid_spec=pltpu.PrefetchScalarGridSpec(
            num_scalar_prefetch=0,
            grid=(B,),
            in_specs=[
                pl.BlockSpec((1, C, L), lambda b: (b, 0, 0)),
                # Constant index_maps: weights / affine params stay resident.
                pl.BlockSpec((Ci, 3 * C), lambda b: (0, 0)),
                pl.BlockSpec((Ci, 1), lambda b: (0, 0)),
                pl.BlockSpec((Ci, 1), lambda b: (0, 0)),
                pl.BlockSpec((C, 3 * Ci), lambda b: (0, 0)),
                pl.BlockSpec((C, 1), lambda b: (0, 0)),
                pl.BlockSpec((C, 1), lambda b: (0, 0)),
            ],
            out_specs=pl.BlockSpec((1, C, L), lambda b: (b, 0, 0)),
        ),
        compiler_params=pltpu.CompilerParams(
            dimension_semantics=("parallel",),   # shard batch over v7x cores
        ),
        cost_estimate=pl.CostEstimate(flops=flops,
                                      transcendentals=transcendentals,
                                      bytes_accessed=bytes_accessed),
    )(x, w1_cat, g1c, b1c, w2_cat, g2c, b2c)


# ----------------------------- references ----------------------------------
def _conv1d_same3_ref(x, w, mxu_bf16):
    # x: [B, Cin, L], w: [Cout, Cin, 3]; PyTorch Conv1d cross-correlation.
    if mxu_bf16:
        x = x.astype(jnp.bfloat16)
        w = w.astype(jnp.bfloat16)
    L = x.shape[-1]
    xp = jnp.pad(x, ((0, 0), (0, 0), (1, 1)))
    y = jnp.zeros((x.shape[0], w.shape[0], L), jnp.float32)
    for k in range(3):
        y = y + jnp.einsum('oc,bcl->bol', w[:, :, k], xp[:, :, k:k + L],
                           preferred_element_type=jnp.float32)
    return y


def _group_norm_ref(y, gamma, beta, num_groups, eps=1e-5):
    B, C, L = y.shape
    yg = y.reshape(B, num_groups, (C // num_groups) * L)
    mean = jnp.mean(yg, axis=-1, keepdims=True)
    var = jnp.mean(jnp.square(yg - mean), axis=-1, keepdims=True)
    yn = ((yg - mean) * lax.rsqrt(var + eps)).reshape(B, C, L)
    return yn * gamma[None, :, None] + beta[None, :, None]


def resblock_ref(x, w1, g1, b1, w2, g2, b2, *, num_groups, mxu_bf16=False):
    y = _conv1d_same3_ref(x, w1, mxu_bf16)
    y = jnp.maximum(y, 0.0)
    y = _group_norm_ref(y, g1, b1, num_groups)
    y = _conv1d_same3_ref(y, w2, mxu_bf16)
    y = jnp.maximum(y, 0.0)
    y = _group_norm_ref(y, g2, b2, num_groups)
    return y + x


if __name__ == "__main__":
    B, C, Ci, L, G = 2, 16, 32, 128, 8   # n_channels=16, n_inner_channels=32

    key = jax.random.PRNGKey(0)
    kx, k1, k2, kg1, kb1, kg2, kb2 = jax.random.split(key, 7)
    x = jax.random.normal(kx, (B, C, L), jnp.float32)
    w1 = jax.random.normal(k1, (Ci, C, 3), jnp.float32) / jnp.sqrt(3.0 * C)
    w2 = jax.random.normal(k2, (C, Ci, 3), jnp.float32) / jnp.sqrt(3.0 * Ci)
    g1 = 1.0 + 0.1 * jax.random.normal(kg1, (Ci,), jnp.float32)
    b1 = 0.1 * jax.random.normal(kb1, (Ci,), jnp.float32)
    g2 = 1.0 + 0.1 * jax.random.normal(kg2, (C,), jnp.float32)
    b2 = 0.1 * jax.random.normal(kb2, (C,), jnp.float32)

    out = jax.block_until_ready(
        resblock_forward(x, w1, g1, b1, w2, g2, b2, num_groups=G))

    ref_match = resblock_ref(x, w1, g1, b1, w2, g2, b2,
                             num_groups=G, mxu_bf16=True)
    ref_f32 = resblock_ref(x, w1, g1, b1, w2, g2, b2,
                           num_groups=G, mxu_bf16=False)

    assert out.shape == x.shape and out.dtype == x.dtype
    # Tight check vs a reference using the same bf16 MXU operands.
    assert jnp.allclose(out, ref_match, atol=1e-2, rtol=1e-2), \
        "mismatch vs bf16-matched reference"
    # Loose semantic check vs the full-f32 PyTorch-equivalent reference
    # (tolerance relaxed because conv operands are bf16 on the MXU).
    assert jnp.allclose(out, ref_f32, atol=1e-1, rtol=1e-1), \
        "mismatch vs f32 reference"

    # TODO(synk): ReLU(inplace=True) has no kernel-level meaning; semantics are
    # identical for the forward pass.
    print("KERNEL_OK")
</pallas_src>

<mosaic_0001>
module attributes {stable_mosaic.version = 11 : i64} {
  func.func @_resblock_kernel(%arg0: i32, %arg1: memref<1x16x128xf32, #tpu.memory_space<vmem>>, %arg2: memref<32x48xbf16, #tpu.memory_space<vmem>>, %arg3: memref<32x1xf32, #tpu.memory_space<vmem>>, %arg4: memref<32x1xf32, #tpu.memory_space<vmem>>, %arg5: memref<16x96xbf16, #tpu.memory_space<vmem>>, %arg6: memref<16x1xf32, #tpu.memory_space<vmem>>, %arg7: memref<16x1xf32, #tpu.memory_space<vmem>>, %arg8: memref<1x16x128xf32, #tpu.memory_space<vmem>>) attributes {dimension_semantics = [#tpu.dimension_semantics<parallel>], iteration_bounds = array<i64: 2>, scalar_prefetch = 0 : i64, scratch_operands = 0 : i64, tpu.core_type = #tpu.core_type<tc>, window_params = [{transform_indices = @transform_0, window_bounds = array<i64: 1, 16, 128>}, {pipeline_mode = #tpu.pipeline_mode<synchronous>, transform_indices = @transform_1, window_bounds = array<i64: 32, 48>}, {pipeline_mode = #tpu.pipeline_mode<synchronous>, transform_indices = @transform_2, window_bounds = array<i64: 32, 1>}, {pipeline_mode = #tpu.pipeline_mode<synchronous>, transform_indices = @transform_3, window_bounds = array<i64: 32, 1>}, {pipeline_mode = #tpu.pipeline_mode<synchronous>, transform_indices = @transform_4, window_bounds = array<i64: 16, 96>}, {pipeline_mode = #tpu.pipeline_mode<synchronous>, transform_indices = @transform_5, window_bounds = array<i64: 16, 1>}, {pipeline_mode = #tpu.pipeline_mode<synchronous>, transform_indices = @transform_6, window_bounds = array<i64: 16, 1>}, {transform_indices = @transform_7, window_bounds = array<i64: 1, 16, 128>}]} {
    %c0 = arith.constant 0 : index
    %c0_0 = arith.constant 0 : index
    %c0_1 = arith.constant 0 : index
    %0 = vector.load %arg1[%c0, %c0_0, %c0_1] : memref<1x16x128xf32, #tpu.memory_space<vmem>>, vector<1x16x128xf32>
    %1 = vector.shape_cast %0 : vector<1x16x128xf32> to vector<16x128xf32>
    %2 = tpu.iota {dimensions = array<i32: 0>} : vector<128x128xi32>
    %3 = tpu.iota {dimensions = array<i32: 1>} : vector<128x128xi32>
    %c1_i32 = arith.constant 1 : i32
    %4 = vector.broadcast %c1_i32 : i32 to vector<128x128xi32>
    %5 = arith.addi %2, %4 : vector<128x128xi32>
    %6 = arith.cmpi eq, %5, %3 : vector<128x128xi32>
    %7 = arith.extui %6 : vector<128x128xi1> to vector<128x128xi32>
    %8 = arith.sitofp %7 : vector<128x128xi32> to vector<128x128xf32>
    %c1_i32_2 = arith.constant 1 : i32
    %9 = vector.broadcast %c1_i32_2 : i32 to vector<128x128xi32>
    %10 = arith.addi %3, %9 : vector<128x128xi32>
    %11 = arith.cmpi eq, %2, %10 : vector<128x128xi32>
    %12 = arith.extui %11 : vector<128x128xi1> to vector<128x128xi32>
    %13 = arith.sitofp %12 : vector<128x128xi32> to vector<128x128xf32>
    %cst = arith.constant dense<0.000000e+00> : vector<16x128xf32>
    %14 = tpu.matmul %1, %8, %cst {dimension_numbers = #tpu.dot_dimension_numbers<[1], [0], [0], [1], [0, 0, 1, 1], [], []>} : vector<16x128xf32>, vector<128x128xf32>, vector<16x128xf32> -> vector<16x128xf32>
    %cst_3 = arith.constant dense<0.000000e+00> : vector<16x128xf32>
    %15 = tpu.matmul %1, %13, %cst_3 {dimension_numbers = #tpu.dot_dimension_numbers<[1], [0], [0], [1], [0, 0, 1, 1], [], []>} : vector<16x128xf32>, vector<128x128xf32>, vector<16x128xf32> -> vector<16x128xf32>
    %16 = tpu.concatenate %14, %1, %15 in 0 : vector<16x128xf32>, vector<16x128xf32>, vector<16x128xf32> -> vector<48x128xf32>
    %17 = arith.truncf %16 : vector<48x128xf32> to vector<48x128xbf16>
    %c0_4 = arith.constant 0 : index
    %c0_5 = arith.constant 0 : index
    %18 = vector.load %arg2[%c0_4, %c0_5] : memref<32x48xbf16, #tpu.memory_space<vmem>>, vector<32x48xbf16>
    %cst_6 = arith.constant dense<0.000000e+00> : vector<32x128xf32>
    %19 = tpu.matmul %18, %17, %cst_6 {dimension_numbers = #tpu.dot_dimension_numbers<[1], [0], [0], [1], [0, 0, 1, 1], [], []>} : vector<32x48xbf16>, vector<48x128xbf16>, vector<32x128xf32> -> vector<32x128xf32>
    %cst_7 = arith.constant 0.000000e+00 : f32
    %20 = vector.broadcast %cst_7 : f32 to vector<32x128xf32>
    %21 = arith.maximumf %19, %20 : vector<32x128xf32>
    %22 = tpu.iota {dimensions = array<i32: 0>} : vector<8x32xi32>
    %23 = tpu.iota {dimensions = array<i32: 1>} : vector<8x32xi32>
    %c4_i32 = arith.constant 4 : i32
    %24 = vector.broadcast %c4_i32 : i32 to vector<8x32xi32>
    %25 = arith.muli %22, %24 : vector<8x32xi32>
    %26 = arith.cmpi sge, %23, %25 : vector<8x32xi32>
    %c1_i32_8 = arith.constant 1 : i32
    %27 = vector.broadcast %c1_i32_8 : i32 to vector<8x32xi32>
    %28 = arith.addi %22, %27 : vector<8x32xi32>
    %c4_i32_9 = arith.constant 4 : i32
    %29 = vector.broadcast %c4_i32_9 : i32 to vector<8x32xi32>
    %30 = arith.muli %28, %29 : vector<8x32xi32>
    %31 = arith.cmpi slt, %23, %30 : vector<8x32xi32>
    %32 = arith.andi %26, %31 : vector<8x32xi1>
    %33 = arith.extui %32 : vector<8x32xi1> to vector<8x32xi32>
    %34 = arith.sitofp %33 : vector<8x32xi32> to vector<8x32xf32>
    %35 = tpu.iota {dimensions = array<i32: 0>} : vector<32x8xi32>
    %36 = tpu.iota {dimensions = array<i32: 1>} : vector<32x8xi32>
    %c4_i32_10 = arith.constant 4 : i32
    %37 = vector.broadcast %c4_i32_10 : i32 to vector<32x8xi32>
    %38 = arith.muli %36, %37 : vector<32x8xi32>
    %39 = arith.cmpi sge, %35, %38 : vector<32x8xi32>
    %c1_i32_11 = arith.constant 1 : i32
    %40 = vector.broadcast %c1_i32_11 : i32 to vector<32x8xi32>
    %41 = arith.addi %36, %40 : vector<32x8xi32>
    %c4_i32_12 = arith.constant 4 : i32
    %42 = vector.broadcast %c4_i32_12 : i32 to vector<32x8xi32>
    %43 = arith.muli %41, %42 : vector<32x8xi32>
    %44 = arith.cmpi slt, %35, %43 : vector<32x8xi32>
    %45 = arith.andi %39, %44 : vector<32x8xi1>
    %46 = arith.extui %45 : vector<32x8xi1> to vector<32x8xi32>
    %47 = arith.sitofp %46 : vector<32x8xi32> to vector<32x8xf32>
    %cst_13 = arith.constant dense<0.000000e+00> : vector<8x128xf32>
    %48 = tpu.matmul %34, %21, %cst_13 {dimension_numbers = #tpu.dot_dimension_numbers<[1], [0], [0], [1], [0, 0, 1, 1], [], []>} : vector<8x32xf32>, vector<32x128xf32>, vector<8x128xf32> -> vector<8x128xf32>
    %cst_14 = arith.constant dense<0.000000e+00> : vector<8xf32>
    %49 = vector.multi_reduction <add>, %48, %cst_14 [1] : vector<8x128xf32> to vector<8xf32>
    %50 = vector.shape_cast %49 : vector<8xf32> to vector<8x1xf32>
    %51 = arith.mulf %21, %21 : vector<32x128xf32>
    %cst_15 = arith.constant dense<0.000000e+00> : vector<8x128xf32>
    %52 = tpu.matmul %34, %51, %cst_15 {dimension_numbers = #tpu.dot_dimension_numbers<[1], [0], [0], [1], [0, 0, 1, 1], [], []>} : vector<8x32xf32>, vector<32x128xf32>, vector<8x128xf32> -> vector<8x128xf32>
    %cst_16 = arith.constant dense<0.000000e+00> : vector<8xf32>
    %53 = vector.multi_reduction <add>, %52, %cst_16 [1] : vector<8x128xf32> to vector<8xf32>
    %54 = vector.shape_cast %53 : vector<8xf32> to vector<8x1xf32>
    %cst_17 = arith.constant 5.120000e+02 : f32
    %55 = vector.broadcast %cst_17 : f32 to vector<8x1xf32>
    %56 = arith.divf %50, %55 : vector<8x1xf32>
    %cst_18 = arith.constant 5.120000e+02 : f32
    %57 = vector.broadcast %cst_18 : f32 to vector<8x1xf32>
    %58 = arith.divf %54, %57 : vector<8x1xf32>
    %59 = arith.mulf %56, %56 : vector<8x1xf32>
    %60 = arith.subf %58, %59 : vector<8x1xf32>
    %cst_19 = arith.constant 0.000000e+00 : f32
    %61 = vector.broadcast %cst_19 : f32 to vector<8x1xf32>
    %62 = arith.maximumf %60, %61 : vector<8x1xf32>
    %cst_20 = arith.constant 9.99999974E-6 : f32
    %63 = vector.broadcast %cst_20 : f32 to vector<8x1xf32>
    %64 = arith.addf %62, %63 : vector<8x1xf32>
    %65 = math.rsqrt %64 : vector<8x1xf32>
    %66 = vector.shape_cast %56 : vector<8x1xf32> to vector<8x1xf32>
    %67 = vector.broadcast %66 : vector<8x1xf32> to vector<8x128xf32>
    %cst_21 = arith.constant dense<0.000000e+00> : vector<32x128xf32>
    %68 = tpu.matmul %47, %67, %cst_21 {dimension_numbers = #tpu.dot_dimension_numbers<[1], [0], [0], [1], [0, 0, 1, 1], [], []>} : vector<32x8xf32>, vector<8x128xf32>, vector<32x128xf32> -> vector<32x128xf32>
    %69 = vector.shape_cast %65 : vector<8x1xf32> to vector<8x1xf32>
    %70 = vector.broadcast %69 : vector<8x1xf32> to vector<8x128xf32>
    %cst_22 = arith.constant dense<0.000000e+00> : vector<32x128xf32>
    %71 = tpu.matmul %47, %70, %cst_22 {dimension_numbers = #tpu.dot_dimension_numbers<[1], [0], [0], [1], [0, 0, 1, 1], [], []>} : vector<32x8xf32>, vector<8x128xf32>, vector<32x128xf32> -> vector<32x128xf32>
    %72 = arith.subf %21, %68 : vector<32x128xf32>
    %73 = arith.mulf %72, %71 : vector<32x128xf32>
    %c0_23 = arith.constant 0 : index
    %c0_24 = arith.constant 0 : index
    %74 = vector.load %arg3[%c0_23, %c0_24] : memref<32x1xf32, #tpu.memory_space<vmem>>, vector<32x1xf32>
    %75 = vector.broadcast %74 : vector<32x1xf32> to vector<32x128xf32>
    %76 = arith.mulf %73, %75 : vector<32x128xf32>
    %c0_25 = arith.constant 0 : index
    %c0_26 = arith.constant 0 : index
    %77 = vector.load %arg4[%c0_25, %c0_26] : memref<32x1xf32, #tpu.memory_space<vmem>>, vector<32x1xf32>
    %78 = vector.broadcast %77 : vector<32x1xf32> to vector<32x128xf32>
    %79 = arith.addf %76, %78 : vector<32x128xf32>
    %cst_27 = arith.constant dense<0.000000e+00> : vector<32x128xf32>
    %80 = tpu.matmul %79, %8, %cst_27 {dimension_numbers = #tpu.dot_dimension_numbers<[1], [0], [0], [1], [0, 0, 1, 1], [], []>} : vector<32x128xf32>, vector<128x128xf32>, vector<32x128xf32> -> vector<32x128xf32>
    %cst_28 = arith.constant dense<0.000000e+00> : vector<32x128xf32>
    %81 = tpu.matmul %79, %13, %cst_28 {dimension_numbers = #tpu.dot_dimension_numbers<[1], [0], [0], [1], [0, 0, 1, 1], [], []>} : vector<32x128xf32>, vector<128x128xf32>, vector<32x128xf32> -> vector<32x128xf32>
    %82 = tpu.concatenate %80, %79, %81 in 0 : vector<32x128xf32>, vector<32x128xf32>, vector<32x128xf32> -> vector<96x128xf32>
    %83 = arith.truncf %82 : vector<96x128xf32> to vector<96x128xbf16>
    %c0_29 = arith.constant 0 : index
    %c0_30 = arith.constant 0 : index
    %84 = vector.load %arg5[%c0_29, %c0_30] : memref<16x96xbf16, #tpu.memory_space<vmem>>, vector<16x96xbf16>
    %cst_31 = arith.constant dense<0.000000e+00> : vector<16x128xf32>
    %85 = tpu.matmul %84, %83, %cst_31 {dimension_numbers = #tpu.dot_dimension_numbers<[1], [0], [0], [1], [0, 0, 1, 1], [], []>} : vector<16x96xbf16>, vector<96x128xbf16>, vector<16x128xf32> -> vector<16x128xf32>
    %cst_32 = arith.constant 0.000000e+00 : f32
    %86 = vector.broadcast %cst_32 : f32 to vector<16x128xf32>
    %87 = arith.maximumf %85, %86 : vector<16x128xf32>
    %88 = tpu.iota {dimensions = array<i32: 0>} : vector<8x16xi32>
    %89 = tpu.iota {dimensions = array<i32: 1>} : vector<8x16xi32>
    %c2_i32 = arith.constant 2 : i32
    %90 = vector.broadcast %c2_i32 : i32 to vector<8x16xi32>
    %91 = arith.muli %88, %90 : vector<8x16xi32>
    %92 = arith.cmpi sge, %89, %91 : vector<8x16xi32>
    %c1_i32_33 = arith.constant 1 : i32
    %93 = vector.broadcast %c1_i32_33 : i32 to vector<8x16xi32>
    %94 = arith.addi %88, %93 : vector<8x16xi32>
    %c2_i32_34 = arith.constant 2 : i32
    %95 = vector.broadcast %c2_i32_34 : i32 to vector<8x16xi32>
    %96 = arith.muli %94, %95 : vector<8x16xi32>
    %97 = arith.cmpi slt, %89, %96 : vector<8x16xi32>
    %98 = arith.andi %92, %97 : vector<8x16xi1>
    %99 = arith.extui %98 : vector<8x16xi1> to vector<8x16xi32>
    %100 = arith.sitofp %99 : vector<8x16xi32> to vector<8x16xf32>
    %101 = tpu.iota {dimensions = array<i32: 0>} : vector<16x8xi32>
    %102 = tpu.iota {dimensions = array<i32: 1>} : vector<16x8xi32>
    %c2_i32_35 = arith.constant 2 : i32
    %103 = vector.broadcast %c2_i32_35 : i32 to vector<16x8xi32>
    %104 = arith.muli %102, %103 : vector<16x8xi32>
    %105 = arith.cmpi sge, %101, %104 : vector<16x8xi32>
    %c1_i32_36 = arith.constant 1 : i32
    %106 = vector.broadcast %c1_i32_36 : i32 to vector<16x8xi32>
    %107 = arith.addi %102, %106 : vector<16x8xi32>
    %c2_i32_37 = arith.constant 2 : i32
    %108 = vector.broadcast %c2_i32_37 : i32 to vector<16x8xi32>
    %109 = arith.muli %107, %108 : vector<16x8xi32>
    %110 = arith.cmpi slt, %101, %109 : vector<16x8xi32>
    %111 = arith.andi %105, %110 : vector<16x8xi1>
    %112 = arith.extui %111 : vector<16x8xi1> to vector<16x8xi32>
    %113 = arith.sitofp %112 : vector<16x8xi32> to vector<16x8xf32>
    %cst_38 = arith.constant dense<0.000000e+00> : vector<8x128xf32>
    %114 = tpu.matmul %100, %87, %cst_38 {dimension_numbers = #tpu.dot_dimension_numbers<[1], [0], [0], [1], [0, 0, 1, 1], [], []>} : vector<8x16xf32>, vector<16x128xf32>, vector<8x128xf32> -> vector<8x128xf32>
    %cst_39 = arith.constant dense<0.000000e+00> : vector<8xf32>
    %115 = vector.multi_reduction <add>, %114, %cst_39 [1] : vector<8x128xf32> to vector<8xf32>
    %116 = vector.shape_cast %115 : vector<8xf32> to vector<8x1xf32>
    %117 = arith.mulf %87, %87 : vector<16x128xf32>
    %cst_40 = arith.constant dense<0.000000e+00> : vector<8x128xf32>
    %118 = tpu.matmul %100, %117, %cst_40 {dimension_numbers = #tpu.dot_dimension_numbers<[1], [0], [0], [1], [0, 0, 1, 1], [], []>} : vector<8x16xf32>, vector<16x128xf32>, vector<8x128xf32> -> vector<8x128xf32>
    %cst_41 = arith.constant dense<0.000000e+00> : vector<8xf32>
    %119 = vector.multi_reduction <add>, %118, %cst_41 [1] : vector<8x128xf32> to vector<8xf32>
    %120 = vector.shape_cast %119 : vector<8xf32> to vector<8x1xf32>
    %cst_42 = arith.constant 2.560000e+02 : f32
    %121 = vector.broadcast %cst_42 : f32 to vector<8x1xf32>
    %122 = arith.divf %116, %121 : vector<8x1xf32>
    %cst_43 = arith.constant 2.560000e+02 : f32
    %123 = vector.broadcast %cst_43 : f32 to vector<8x1xf32>
    %124 = arith.divf %120, %123 : vector<8x1xf32>
    %125 = arith.mulf %122, %122 : vector<8x1xf32>
    %126 = arith.subf %124, %125 : vector<8x1xf32>
    %cst_44 = arith.constant 0.000000e+00 : f32
    %127 = vector.broadcast %cst_44 : f32 to vector<8x1xf32>
    %128 = arith.maximumf %126, %127 : vector<8x1xf32>
    %cst_45 = arith.constant 9.99999974E-6 : f32
    %129 = vector.broadcast %cst_45 : f32 to vector<8x1xf32>
    %130 = arith.addf %128, %129 : vector<8x1xf32>
    %131 = math.rsqrt %130 : vector<8x1xf32>
    %132 = vector.shape_cast %122 : vector<8x1xf32> to vector<8x1xf32>
    %133 = vector.broadcast %132 : vector<8x1xf32> to vector<8x128xf32>
    %cst_46 = arith.constant dense<0.000000e+00> : vector<16x128xf32>
    %134 = tpu.matmul %113, %133, %cst_46 {dimension_numbers = #tpu.dot_dimension_numbers<[1], [0], [0], [1], [0, 0, 1, 1], [], []>} : vector<16x8xf32>, vector<8x128xf32>, vector<16x128xf32> -> vector<16x128xf32>
    %135 = vector.shape_cast %131 : vector<8x1xf32> to vector<8x1xf32>
    %136 = vector.broadcast %135 : vector<8x1xf32> to vector<8x128xf32>
    %cst_47 = arith.constant dense<0.000000e+00> : vector<16x128xf32>
    %137 = tpu.matmul %113, %136, %cst_47 {dimension_numbers = #tpu.dot_dimension_numbers<[1], [0], [0], [1], [0, 0, 1, 1], [], []>} : vector<16x8xf32>, vector<8x128xf32>, vector<16x128xf32> -> vector<16x128xf32>
    %138 = arith.subf %87, %134 : vector<16x128xf32>
    %139 = arith.mulf %138, %137 : vector<16x128xf32>
    %c0_48 = arith.constant 0 : index
    %c0_49 = arith.constant 0 : index
    %140 = vector.load %arg6[%c0_48, %c0_49] : memref<16x1xf32, #tpu.memory_space<vmem>>, vector<16x1xf32>
    %141 = vector.broadcast %140 : vector<16x1xf32> to vector<16x128xf32>
    %142 = arith.mulf %139, %141 : vector<16x128xf32>
    %c0_50 = arith.constant 0 : index
    %c0_51 = arith.constant 0 : index
    %143 = vector.load %arg7[%c0_50, %c0_51] : memref<16x1xf32, #tpu.memory_space<vmem>>, vector<16x1xf32>
    %144 = vector.broadcast %143 : vector<16x1xf32> to vector<16x128xf32>
    %145 = arith.addf %142, %144 : vector<16x128xf32>
    %146 = arith.addf %145, %1 : vector<16x128xf32>
    %c0_52 = arith.constant 0 : index
    %c0_53 = arith.constant 0 : index
    %c0_54 = arith.constant 0 : index
    %147 = vector.load %arg8[%c0_52, %c0_53, %c0_54] : memref<1x16x128xf32, #tpu.memory_space<vmem>>, vector<1x16x128xf32>
    %148 = vector.shape_cast %147 : vector<1x16x128xf32> to vector<16x128xf32>
    %149 = vector.shape_cast %146 : vector<16x128xf32> to vector<1x16x128xf32>
    tpu.vector_store %arg8[%c0_52, %c0_53, %c0_54], %149 {strides = array<i32>} : memref<1x16x128xf32, #tpu.memory_space<vmem>>, vector<1x16x128xf32>,
    return
  }
  func.func @transform_0(%arg0: i32) -> (i32, i32, i32) {
    %c0_i32 = arith.constant 0 : i32
    %c0_i32_0 = arith.constant 0 : i32
    %c0_i32_1 = arith.constant 0 : i32
    return %arg0, %c0_i32, %c0_i32_0 : i32, i32, i32
  }
  func.func @transform_1(%arg0: i32) -> (i32, i32) {
    %c0_i32 = arith.constant 0 : i32
    %c0_i32_0 = arith.constant 0 : i32
    %c0_i32_1 = arith.constant 0 : i32
    return %c0_i32, %c0_i32_0 : i32, i32
  }
  func.func @transform_2(%arg0: i32) -> (i32, i32) {
    %c0_i32 = arith.constant 0 : i32
    %c0_i32_0 = arith.constant 0 : i32
    %c0_i32_1 = arith.constant 0 : i32
    return %c0_i32, %c0_i32_0 : i32, i32
  }
  func.func @transform_3(%arg0: i32) -> (i32, i32) {
    %c0_i32 = arith.constant 0 : i32
    %c0_i32_0 = arith.constant 0 : i32
    %c0_i32_1 = arith.constant 0 : i32
    return %c0_i32, %c0_i32_0 : i32, i32
  }
  func.func @transform_4(%arg0: i32) -> (i32, i32) {
    %c0_i32 = arith.constant 0 : i32
    %c0_i32_0 = arith.constant 0 : i32
    %c0_i32_1 = arith.constant 0 : i32
    return %c0_i32, %c0_i32_0 : i32, i32
  }
  func.func @transform_5(%arg0: i32) -> (i32, i32) {
    %c0_i32 = arith.constant 0 : i32
    %c0_i32_0 = arith.constant 0 : i32
    %c0_i32_1 = arith.constant 0 : i32
    return %c0_i32, %c0_i32_0 : i32, i32
  }
  func.func @transform_6(%arg0: i32) -> (i32, i32) {
    %c0_i32 = arith.constant 0 : i32
    %c0_i32_0 = arith.constant 0 : i32
    %c0_i32_1 = arith.constant 0 : i32
    return %c0_i32, %c0_i32_0 : i32, i32
  }
  func.func @transform_7(%arg0: i32) -> (i32, i32, i32) {
    %c0_i32 = arith.constant 0 : i32
    %c0_i32_0 = arith.constant 0 : i32
    %c0_i32_1 = arith.constant 0 : i32
    return %arg0, %c0_i32, %c0_i32_0 : i32, i32, i32
  }
}

</mosaic_0001>

<llo_original>
// kernel: tpu_custom_call.1
$region0: #{tpu_custom_call.1}
  #allocation0 [shape = 'u32[]', space=smem, size = 0x4, offset = 0x4, fixed_abs, tag = 'smem constant byte address 0x4 - core index']
  #allocation1 [shape = 'u32[72,128]{1,0:T(1,128)}', space=vmem, size = 0x9000, scoped, tag = 'internal scratch']
  %s0 = inlined_call_operand.vmem [shape: f32[2,16,128], index: 0, kind: input, shape index: {}]
  %s1 = inlined_call_operand.vmem [shape: bf16[32,48], index: 1, kind: input, shape index: {}]
  %s2 = inlined_call_operand.vmem [shape: f32[32,1], index: 2, kind: input, shape index: {}]
  %s3 = inlined_call_operand.vmem [shape: f32[32,1], index: 3, kind: input, shape index: {}]
  %s4 = inlined_call_operand.vmem [shape: bf16[16,96], index: 4, kind: input, shape index: {}]
  %s5 = inlined_call_operand.vmem [shape: f32[16,1], index: 5, kind: input, shape index: {}]
  %s6 = inlined_call_operand.vmem [shape: f32[16,1], index: 6, kind: input, shape index: {}]
  %s7 = inlined_call_operand.hbm [shape: f32[2,16,128], index: 7, kind: output, shape index: {}]
  %s8 = sld [smem:[#allocation0]]
  $region61: #{tpu_custom_call.1} parent=0
    _
  %s10 = ssub.s32 1, %s8
  %s11 = scalar_select 0, %s10, %s8
  $region1: #{tpu_custom_call.1} parent=0
    #allocation2 [shape = 'u8[16384]{0}', space=vmem, size = 0x4000, scoped, tag = 'output window, operand 0']
    #allocation3 [shape = 's32[2]{0}', space=sflag, size = 0x8, scoped, tag = 'scoped memory for tpu_custom_call.1']
    %12 = vsyncpa [#allocation3], 0
    %s13 = scalar_lea.sflag [#allocation3], 1
    %14 = vsyncpa %s13, 0
    loop: start=0, step=1, limit=4
    $region2: #{tpu_custom_call.1} parent=1 // loop_pre_header
      _
    $region3: #{tpu_custom_call.1} parent=1 // loop_header
      %s16 = sphi 0, %s20
      %p17 = scmp.ge.s32.totalorder %s16, 4
      %s26 = sphi 0, %s28
      %s29 = sphi 0, %s26
      %s30 = sphi 0, %s29
      %s46 = sphi 0, %s30
      %s50 = sphi 0, %s50
      %s52 = sphi 0, %s50
      %s53 = sphi 0, %s52
      %s67 = sphi 0, %s53
      %s71 = sphi 0, %s71
      %s73 = sphi 0, %s71
      %s74 = sphi 0, %s73
      %s88 = sphi 0, %s74
      %s92 = sphi 0, %s92
      %s94 = sphi 0, %s92
      %s95 = sphi 0, %s94
      %s109 = sphi 0, %s95
      %s113 = sphi 0, %s113
      %s115 = sphi 0, %s113
      %s116 = sphi 0, %s115
      %s130 = sphi 0, %s116
      %s134 = sphi 0, %s134
      %s136 = sphi 0, %s134
      %s137 = sphi 0, %s136
      %s151 = sphi 0, %s137
      %s155 = sphi 0, %s155
      %s157 = sphi 0, %s155
      %s158 = sphi 0, %s157
      %s172 = sphi 0, %s158
      %s178 = sphi 0, %s180
      %s181 = sphi 0, %s178
      %s182 = sphi 0, %s181
      %s198 = sphi 0, %s182
    $region4: #{tpu_custom_call.1} parent=1 // loop_header_branch
      %19 = sbr.rel (%p17) target = $region8
    $region5: #{tpu_custom_call.1} parent=1 // loop_body
      %s21 = ssub.s32 %s16, 1
      %s22 = ssub.s32 %s16, 2
      %s23 = sadd.s32 %s16, 1
      %s24 = ssub.s32 %s16, %s23
      %p25 = scmp.eq.s32.totalorder %s24, 0
      %s27 = sadd.s32 %s26, 1
      %s28 = scalar_select %p25, %s26, %s27
      %p31 = pneg %p25
      %p32 = scmp.eq.s32.totalorder %s16, 1
      %p33 = por %p31, %p32
      %p34 = scmp.ne.s32.totalorder %s26, %s29
      %p35 = scmp.eq.s32.totalorder %s16, 0
      %p36 = por %p34, %p35
      %p37 = scmp.ne.s32.totalorder %s26, %s29
      %p38 = scmp.eq.s32.totalorder %s21, 1
      %p39 = por %p37, %p38
      %p40 = scmp.ne.s32.totalorder %s29, %s30
      %p41 = scmp.eq.s32.totalorder %s21, 0
      %p42 = por %p40, %p41
      %p43 = scmp.ne.s32.totalorder %s29, %s30
      %p44 = scmp.eq.s32.totalorder %s22, 1
      %p45 = por %p43, %p44
      %p47 = scmp.ne.s32.totalorder %s30, %s46
      %p48 = scmp.eq.s32.totalorder %s22, 0
      %p49 = por %p47, %p48
      %s51 = sadd.s32 %s50, 1
      %p54 = scmp.eq.s32.totalorder %s16, 1
      %p55 = scmp.ne.s32.totalorder %s50, %s52
      %p56 = scmp.eq.s32.totalorder %s16, 0
      %p57 = por %p55, %p56
      %p58 = scmp.ne.s32.totalorder %s50, %s52
      %p59 = scmp.eq.s32.totalorder %s21, 1
      %p60 = por %p58, %p59
      %p61 = scmp.ne.s32.totalorder %s52, %s53
      %p62 = scmp.eq.s32.totalorder %s21, 0
      %p63 = por %p61, %p62
      %p64 = scmp.ne.s32.totalorder %s52, %s53
      %p65 = scmp.eq.s32.totalorder %s22, 1
      %p66 = por %p64, %p65
      %p68 = scmp.ne.s32.totalorder %s53, %s67
      %p69 = scmp.eq.s32.totalorder %s22, 0
      %p70 = por %p68, %p69
      %s72 = sadd.s32 %s71, 1
      %p75 = scmp.eq.s32.totalorder %s16, 1
      %p76 = scmp.ne.s32.totalorder %s71, %s73
      %p77 = scmp.eq.s32.totalorder %s16, 0
      %p78 = por %p76, %p77
      %p79 = scmp.ne.s32.totalorder %s71, %s73
      %p80 = scmp.eq.s32.totalorder %s21, 1
      %p81 = por %p79, %p80
      %p82 = scmp.ne.s32.totalorder %s73, %s74
      %p83 = scmp.eq.s32.totalorder %s21, 0
      %p84 = por %p82, %p83
      %p85 = scmp.ne.s32.totalorder %s73, %s74
      %p86 = scmp.eq.s32.totalorder %s22, 1
      %p87 = por %p85, %p86
      %p89 = scmp.ne.s32.totalorder %s74, %s88
      %p90 = scmp.eq.s32.totalorder %s22, 0
      %p91 = por %p89, %p90
      %s93 = sadd.s32 %s92, 1
      %p96 = scmp.eq.s32.totalorder %s16, 1
      %p97 = scmp.ne.s32.totalorder %s92, %s94
      %p98 = scmp.eq.s32.totalorder %s16, 0
      %p99 = por %p97, %p98
      %p100 = scmp.ne.s32.totalorder %s92, %s94
      %p101 = scmp.eq.s32.totalorder %s21, 1
      %p102 = por %p100, %p101
      %p103 = scmp.ne.s32.totalorder %s94, %s95
      %p104 = scmp.eq.s32.totalorder %s21, 0
      %p105 = por %p103, %p104
      %p106 = scmp.ne.s32.totalorder %s94, %s95
      %p107 = scmp.eq.s32.totalorder %s22, 1
      %p108 = por %p106, %p107
      %p110 = scmp.ne.s32.totalorder %s95, %s109
      %p111 = scmp.eq.s32.totalorder %s22, 0
      %p112 = por %p110, %p111
      %s114 = sadd.s32 %s113, 1
      %p117 = scmp.eq.s32.totalorder %s16, 1
      %p118 = scmp.ne.s32.totalorder %s113, %s115
      %p119 = scmp.eq.s32.totalorder %s16, 0
      %p120 = por %p118, %p119
      %p121 = scmp.ne.s32.totalorder %s113, %s115
      %p122 = scmp.eq.s32.totalorder %s21, 1
      %p123 = por %p121, %p122
      %p124 = scmp.ne.s32.totalorder %s115, %s116
      %p125 = scmp.eq.s32.totalorder %s21, 0
      %p126 = por %p124, %p125
      %p127 = scmp.ne.s32.totalorder %s115, %s116
      %p128 = scmp.eq.s32.totalorder %s22, 1
      %p129 = por %p127, %p128
      %p131 = scmp.ne.s32.totalorder %s116, %s130
      %p132 = scmp.eq.s32.totalorder %s22, 0
      %p133 = por %p131, %p132
      %s135 = sadd.s32 %s134, 1
      %p138 = scmp.eq.s32.totalorder %s16, 1
      %p139 = scmp.ne.s32.totalorder %s134, %s136
      %p140 = scmp.eq.s32.totalorder %s16, 0
      %p141 = por %p139, %p140
      %p142 = scmp.ne.s32.totalorder %s134, %s136
      %p143 = scmp.eq.s32.totalorder %s21, 1
      %p144 = por %p142, %p143
      %p145 = scmp.ne.s32.totalorder %s136, %s137
      %p146 = scmp.eq.s32.totalorder %s21, 0
      %p147 = por %p145, %p146
      %p148 = scmp.ne.s32.totalorder %s136, %s137
      %p149 = scmp.eq.s32.totalorder %s22, 1
      %p150 = por %p148, %p149
      %p152 = scmp.ne.s32.totalorder %s137, %s151
      %p153 = scmp.eq.s32.totalorder %s22, 0
      %p154 = por %p152, %p153
      %s156 = sadd.s32 %s155, 1
      %p159 = scmp.eq.s32.totalorder %s16, 1
      %p160 = scmp.ne.s32.totalorder %s155, %s157
      %p161 = scmp.eq.s32.totalorder %s16, 0
      %p162 = por %p160, %p161
      %p163 = scmp.ne.s32.totalorder %s155, %s157
      %p164 = scmp.eq.s32.totalorder %s21, 1
      %p165 = por %p163, %p164
      %p166 = scmp.ne.s32.totalorder %s157, %s158
      %p167 = scmp.eq.s32.totalorder %s21, 0
      %p168 = por %p166, %p167
      %p169 = scmp.ne.s32.totalorder %s157, %s158
      %p170 = scmp.eq.s32.totalorder %s22, 1
      %p171 = por %p169, %p170
      %p173 = scmp.ne.s32.totalorder %s158, %s172
      %p174 = scmp.eq.s32.totalorder %s22, 0
      %p175 = por %p173, %p174
      %s176 = ssub.s32 %s16, %s23
      %p177 = scmp.eq.s32.totalorder %s176, 0
      %s179 = sadd.s32 %s178, 1
      %s180 = scalar_select %p177, %s178, %s179
      %p183 = pneg %p177
      %p184 = scmp.eq.s32.totalorder %s16, 1
      %p185 = por %p183, %p184
      %p186 = scmp.ne.s32.totalorder %s178, %s181
      %p187 = scmp.eq.s32.totalorder %s16, 0
      %p188 = por %p186, %p187
      %p189 = scmp.ne.s32.totalorder %s178, %s181
      %p190 = scmp.eq.s32.totalorder %s21, 1
      %p191 = por %p189, %p190
      %p192 = scmp.ne.s32.totalorder %s181, %s182
      %p193 = scmp.eq.s32.totalorder %s21, 0
      %p194 = por %p192, %p193
      %p195 = scmp.ne.s32.totalorder %s181, %s182
      %p196 = scmp.eq.s32.totalorder %s22, 1
      %p197 = por %p195, %p196
      %p199 = scmp.ne.s32.totalorder %s182, %s198
      %p200 = scmp.eq.s32.totalorder %s22, 0
      %p201 = por %p199, %p200
      %p202 = scmp.le.s32.totalorder 1, %s16
      %p203 = scmp.lt.s32.totalorder %s16, 3
      %p204 = pnand %p202, %p203
      %p205 = pneg %p204
      // Predicated region
      $region9: #{tpu_custom_call.1} parent=5 // pred_check
        _
      $region10: #{tpu_custom_call.1} parent=5 // pred_check_branch
        %207 = sbr.rel (%p204) target = $region12
      $region11: #{tpu_custom_call.1} parent=5 // pred_region
        %s208 = ssub.s32 %s16, 1
        // Predicated region
        $region13: #{tpu_custom_call.1} parent=11 // pred_check
          %p209 = pneg %p63
        $region14: #{tpu_custom_call.1} parent=11 // pred_check_branch
          %211 = sbr.rel (%p209) target = $region16
        $region15: #{tpu_custom_call.1} parent=11 // pred_region
          _
        $region16: #{tpu_custom_call.1} parent=11 // pred_fallthru
          _
        // Predicated region
        $region17: #{tpu_custom_call.1} parent=11 // pred_check
          %p212 = pneg %p84
        $region18: #{tpu_custom_call.1} parent=11 // pred_check_branch
          %214 = sbr.rel (%p212) target = $region20
        $region19: #{tpu_custom_call.1} parent=11 // pred_region
          _
        $region20: #{tpu_custom_call.1} parent=11 // pred_fallthru
          _
        // Predicated region
        $region21: #{tpu_custom_call.1} parent=11 // pred_check
          %p215 = pneg %p105
        $region22: #{tpu_custom_call.1} parent=11 // pred_check_branch
          %217 = sbr.rel (%p215) target = $region24
        $region23: #{tpu_custom_call.1} parent=11 // pred_region
          _
        $region24: #{tpu_custom_call.1} parent=11 // pred_fallthru
          _
        // Predicated region
        $region25: #{tpu_custom_call.1} parent=11 // pred_check
          %p218 = pneg %p126
        $region26: #{tpu_custom_call.1} parent=11 // pred_check_branch
          %220 = sbr.rel (%p218) target = $region28
        $region27: #{tpu_custom_call.1} parent=11 // pred_region
          _
        $region28: #{tpu_custom_call.1} parent=11 // pred_fallthru
          _
        // Predicated region
        $region29: #{tpu_custom_call.1} parent=11 // pred_check
          %p221 = pneg %p147
        $region30: #{tpu_custom_call.1} parent=11 // pred_check_branch
          %223 = sbr.rel (%p221) target = $region32
        $region31: #{tpu_custom_call.1} parent=11 // pred_region
          _
        $region32: #{tpu_custom_call.1} parent=11 // pred_fallthru
          _
        // Predicated region
        $region33: #{tpu_custom_call.1} parent=11 // pred_check
          %p224 = pneg %p168
        $region34: #{tpu_custom_call.1} parent=11 // pred_check_branch
          %226 = sbr.rel (%p224) target = $region36
        $region35: #{tpu_custom_call.1} parent=11 // pred_region
          _
        $region36: #{tpu_custom_call.1} parent=11 // pred_fallthru
          _
      $region12: #{tpu_custom_call.1} parent=5 // pred_fallthru
        _
      %p227 = scmp.lt.s32.totalorder %s16, 2
      // Predicated region
      $region37: #{tpu_custom_call.1} parent=5 // pred_check
        %p228 = pneg %p227
      $region38: #{tpu_custom_call.1} parent=5 // pred_check_branch
        %230 = sbr.rel (%p228) target = $region40
      $region39: #{tpu_custom_call.1} parent=5 // pred_region
        // Predicated region
        $region41: #{tpu_custom_call.1} parent=39 // pred_check
          %p231 = pneg %p36
        $region42: #{tpu_custom_call.1} parent=39 // pred_check_branch
          %233 = sbr.rel (%p231) target = $region44
        $region43: #{tpu_custom_call.1} parent=39 // pred_region
          %p234 = scmp.lt.s32.totalorder %s16, 1
          %s235 = scalar_select %p234, %s16, 1
          %s236 = smul.addr %s235, 2
          %s237 = smul.addr %s236, 8
          %s238 = scalar_lea.vmem %s0, %s237
        $region44: #{tpu_custom_call.1} parent=39 // pred_fallthru
          _
      $region40: #{tpu_custom_call.1} parent=5 // pred_fallthru
        _
      %p239 = scmp.le.s32.totalorder 1, %s16
      %p240 = scmp.lt.s32.totalorder %s16, 3
      %p241 = pnand %p239, %p240
      %p242 = pneg %p241
      // Predicated region
      $region45: #{tpu_custom_call.1} parent=5 // pred_check
        _
      $region46: #{tpu_custom_call.1} parent=5 // pred_check_branch
        %244 = sbr.rel (%p241) target = $region48
      $region47: #{tpu_custom_call.1} parent=5 // pred_region
        %s245 = ssub.s32 %s16, 1
        %p246 = scmp.lt.s32.totalorder %s21, 1
        %s247 = scalar_select %p246, %s21, 1
        %s248 = smul.addr %s247, 2
        %s249 = smul.addr %s248, 8
        %s250 = scalar_lea.vmem %s0, %s249
        %p251 = pneg %p42
        %p252 = pneg %p39
        %p253 = pneg %p63
        %p254 = pneg %p60
        %p255 = pneg %p84
        %p256 = pneg %p81
        %p257 = pneg %p105
        %p258 = pneg %p102
        %p259 = pneg %p126
        %p260 = pneg %p123
        %p261 = pneg %p147
        %p262 = pneg %p144
        %p263 = pneg %p168
        %p264 = pneg %p165
        %p265 = pneg %p194
        %p266 = pneg %p191
        %s267 = sand.u32 %s181, 1
        %s268 = scalar_lea.sflag [#allocation3], %s267
        %s269 = sand.u32 %s181, 1
        %s270 = smul.addr %s269, 16
        %s271 = scalar_lea.vmem [#allocation2], %s270
        %p272 = scmp.lt.s32.totalorder %s21, 1
        %s273 = scalar_select %p272, %s21, 1
        %s274 = smul.addr %s273, 2
        %s275 = smul.addr %s274, 8
        %s276 = scalar_lea.vmem %s0, %s275
        %v278 = vld [vmem:[%s276] sm:$0xff]
        %v279 = vld [vmem:[%s276 + $0x8] sm:$0xff]
        %v280 = vlaneseq
        %v281 = vshrl.u32 %v280, 7
        %v282 = vadd.s32 %v281, 8
        %v283 = vadd.s32 %v281, 16
        %v284 = vadd.s32 %v281, 24
        %v285 = vadd.s32 %v281, 32
        %v286 = vadd.s32 %v281, 40
        %v287 = vadd.s32 %v281, 48
        %v288 = vadd.s32 %v281, 56
        %v289 = vadd.s32 %v281, 64
        %v290 = vadd.s32 %v281, 72
        %v291 = vadd.s32 %v281, 80
        %v292 = vadd.s32 %v281, 88
        %v293 = vadd.s32 %v281, 96
        %v294 = vadd.s32 %v281, 104
        %v295 = vadd.s32 %v281, 112
        %v296 = vadd.s32 %v281, 120
        %v297 = vlaneseq
        %v298 = vand.u32 %v297, 127
        %v299 = vadd.s32 %v281, 1
        %v300 = vadd.s32 %v282, 1
        %v301 = vadd.s32 %v283, 1
        %v302 = vadd.s32 %v284, 1
        %v303 = vadd.s32 %v285, 1
        %v304 = vadd.s32 %v286, 1
        %v305 = vadd.s32 %v287, 1
        %v306 = vadd.s32 %v288, 1
        %v307 = vadd.s32 %v289, 1
        %v308 = vadd.s32 %v290, 1
        %v309 = vadd.s32 %v291, 1
        %v310 = vadd.s32 %v292, 1
        %v311 = vadd.s32 %v293, 1
        %v312 = vadd.s32 %v294, 1
        %v313 = vadd.s32 %v295, 1
        %v314 = vadd.s32 %v296, 1
        %vm315 = vcmp.eq.s32.totalorder %v299, %v298
        %vm316 = vcmp.eq.s32.totalorder %v300, %v298
        %vm317 = vcmp.eq.s32.totalorder %v301, %v298
        %vm318 = vcmp.eq.s32.totalorder %v302, %v298
        %vm319 = vcmp.eq.s32.totalorder %v303, %v298
        %vm320 = vcmp.eq.s32.totalorder %v304, %v298
        %vm321 = vcmp.eq.s32.totalorder %v305, %v298
        %vm322 = vcmp.eq.s32.totalorder %v306, %v298
        %vm323 = vcmp.eq.s32.totalorder %v307, %v298
        %vm324 = vcmp.eq.s32.totalorder %v308, %v298
        %vm325 = vcmp.eq.s32.totalorder %v309, %v298
        %vm326 = vcmp.eq.s32.totalorder %v310, %v298
        %vm327 = vcmp.eq.s32.totalorder %v311, %v298
        %vm328 = vcmp.eq.s32.totalorder %v312, %v298
        %vm329 = vcmp.eq.s32.totalorder %v313, %v298
        %vm330 = vcmp.eq.s32.totalorder %v314, %v298
        %v331 = vsel %vm315, 1, 0
        %v332 = vsel %vm316, 1, 0
        %v333 = vsel %vm317, 1, 0
        %v334 = vsel %vm318, 1, 0
        %v335 = vsel %vm319, 1, 0
        %v336 = vsel %vm320, 1, 0
        %v337 = vsel %vm321, 1, 0
        %v338 = vsel %vm322, 1, 0
        %v339 = vsel %vm323, 1, 0
        %v340 = vsel %vm324, 1, 0
        %v341 = vsel %vm325, 1, 0
        %v342 = vsel %vm326, 1, 0
        %v343 = vsel %vm327, 1, 0
        %v344 = vsel %vm328, 1, 0
        %v345 = vsel %vm329, 1, 0
        %v346 = vsel %vm330, 1, 0
        %v347 = vcvt.s32.f32 %v331
        %v348 = vcvt.s32.f32 %v332
        %v349 = vcvt.s32.f32 %v333
        %v350 = vcvt.s32.f32 %v334
        %v351 = vcvt.s32.f32 %v335
        %v352 = vcvt.s32.f32 %v336
        %v353 = vcvt.s32.f32 %v337
        %v354 = vcvt.s32.f32 %v338
        %v355 = vcvt.s32.f32 %v339
        %v356 = vcvt.s32.f32 %v340
        %v357 = vcvt.s32.f32 %v341
        %v358 = vcvt.s32.f32 %v342
        %v359 = vcvt.s32.f32 %v343
        %v360 = vcvt.s32.f32 %v344
        %v361 = vcvt.s32.f32 %v345
        %v362 = vcvt.s32.f32 %v346
        %v363 = vadd.s32 %v298, 1
        %vm364 = vcmp.eq.s32.totalorder %v281, %v363
        %vm365 = vcmp.eq.s32.totalorder %v282, %v363
        %vm366 = vcmp.eq.s32.totalorder %v283, %v363
        %vm367 = vcmp.eq.s32.totalorder %v284, %v363
        %vm368 = vcmp.eq.s32.totalorder %v285, %v363
        %vm369 = vcmp.eq.s32.totalorder %v286, %v363
        %vm370 = vcmp.eq.s32.totalorder %v287, %v363
        %vm371 = vcmp.eq.s32.totalorder %v288, %v363
        %vm372 = vcmp.eq.s32.totalorder %v289, %v363
        %vm373 = vcmp.eq.s32.totalorder %v290, %v363
        %vm374 = vcmp.eq.s32.totalorder %v291, %v363
        %vm375 = vcmp.eq.s32.totalorder %v292, %v363
        %vm376 = vcmp.eq.s32.totalorder %v293, %v363
        %vm377 = vcmp.eq.s32.totalorder %v294, %v363
        %vm378 = vcmp.eq.s32.totalorder %v295, %v363
        %vm379 = vcmp.eq.s32.totalorder %v296, %v363
        %v380 = vsel %vm364, 1, 0
        %v381 = vsel %vm365, 1, 0
        %v382 = vsel %vm366, 1, 0
        %v383 = vsel %vm367, 1, 0
        %v384 = vsel %vm368, 1, 0
        %v385 = vsel %vm369, 1, 0
        %v386 = vsel %vm370, 1, 0
        %v387 = vsel %vm371, 1, 0
        %v388 = vsel %vm372, 1, 0
        %v389 = vsel %vm373, 1, 0
        %v390 = vsel %vm374, 1, 0
        %v391 = vsel %vm375, 1, 0
        %v392 = vsel %vm376, 1, 0
        %v393 = vsel %vm377, 1, 0
        %v394 = vsel %vm378, 1, 0
        %v395 = vsel %vm379, 1, 0
        %v396 = vcvt.s32.f32 %v380
        %v397 = vcvt.s32.f32 %v381
        %v398 = vcvt.s32.f32 %v382
        %v399 = vcvt.s32.f32 %v383
        %v400 = vcvt.s32.f32 %v384
        %v401 = vcvt.s32.f32 %v385
        %v402 = vcvt.s32.f32 %v386
        %v403 = vcvt.s32.f32 %v387
        %v404 = vcvt.s32.f32 %v388
        %v405 = vcvt.s32.f32 %v389
        %v406 = vcvt.s32.f32 %v390
        %v407 = vcvt.s32.f32 %v391
        %v408 = vcvt.s32.f32 %v392
        %v409 = vcvt.s32.f32 %v393
        %v410 = vcvt.s32.f32 %v394
        %v411 = vcvt.s32.f32 %v395
        %412 = vmatpush.msra.mxu0 %v362
        %413 = vmatpush.msra.mxu0 %v361
        %414 = vmatpush.msra.mxu0 %v360
        %415 = vmatpush.msra.mxu0 %v359
        %416 = vmatpush.msra.mxu0 %v358
        %417 = vmatpush.msra.mxu0 %v357
        %418 = vmatpush.msra.mxu0 %v356
        %419 = vmatpush.msra.mxu0 %v355
        %420 = vmatpush.msra.mxu0 %v354
        %421 = vmatpush.msra.mxu0 %v353
        %422 = vmatpush.msra.mxu0 %v352
        %423 = vmatpush.msra.mxu0 %v351
        %424 = vmatpush.msra.mxu0 %v350
        %425 = vmatpush.msra.mxu0 %v349
        %426 = vmatpush.msra.mxu0 %v348
        %427 = vmatpush.msra.mxu0 %v347
        %428 = vmatmul.f32.gmra.mxu0 %v278
        %v429 = vpop.f32.mrf.mxu0
        %v430 = vadd.f32 0.0, %v429
        %431 = vmatmul.f32.gmra.mxu0 %v279
        %v432 = vpop.f32.mrf.mxu0
        %v433 = vadd.f32 0.0, %v432
        %434 = vdwg.mxu0
        %435 = vmatpush.msra.mxu0 %v411
        %436 = vmatpush.msra.mxu0 %v410
        %437 = vmatpush.msra.mxu0 %v409
        %438 = vmatpush.msra.mxu0 %v408
        %439 = vmatpush.msra.mxu0 %v407
        %440 = vmatpush.msra.mxu0 %v406
        %441 = vmatpush.msra.mxu0 %v405
        %442 = vmatpush.msra.mxu0 %v404
        %443 = vmatpush.msra.mxu0 %v403
        %444 = vmatpush.msra.mxu0 %v402
        %445 = vmatpush.msra.mxu0 %v401
        %446 = vmatpush.msra.mxu0 %v400
        %447 = vmatpush.msra.mxu0 %v399
        %448 = vmatpush.msra.mxu0 %v398
        %449 = vmatpush.msra.mxu0 %v397
        %450 = vmatpush.msra.mxu0 %v396
        %451 = vmatmul.f32.gmra.mxu0 %v278
        %v452 = vpop.f32.mrf.mxu0
        %v453 = vadd.f32 0.0, %v452
        %454 = vmatmul.f32.gmra.mxu0 %v279
        %v455 = vpop.f32.mrf.mxu0
        %v456 = vadd.f32 0.0, %v455
        %457 = vdwg.mxu0
        %v458 = vpack.c.bf16 %v433, %v430
        %v459 = vpack.c.bf16 %v279, %v278
        %v460 = vpack.c.bf16 %v456, %v453
        %v461 = vld [vmem:[%s1] sm:$0xf]
        %v462 = vld [vmem:[%s1 + $0x4] sm:$0xf]
        %v463 = vld [vmem:[%s1 + $0x8] sm:$0xf]
        %v464 = vld [vmem:[%s1 + $0xc] sm:$0xf]
        %v469 = vunpack.c.l.b16 %v461
        %v470 = vunpack.c.l.b16 %v462
        %v471 = vunpack.c.l.b16 %v463
        %v472 = vunpack.c.l.b16 %v464
        %v473 = vpack.c.b16 %v470, %v469
        %v474 = vpack.c.b16 %v472, %v471
        %vm475 = vcmask 392192
        %v477 = vsel %vm475, %v473, 0
        %v480 = vsel %vm475, %v474, 0
        %482 = vmatpush.bf16.msra.mxu0 0
        %483 = vmatpush.bf16.msra.mxu0 0
        %484 = vmatpush.bf16.msra.mxu0 0
        %485 = vmatpush.bf16.msra.mxu0 0
        %486 = vmatpush.bf16.msra.mxu0 0
        %487 = vmatpush.bf16.msra.mxu0 %v460
        %488 = vmatpush.bf16.msra.mxu0 %v459
        %489 = vmatpush.bf16.msra.mxu0 %v458
        %490 = vmatmul.bf16.gmra.mxu0 %v477
        %v491 = vpop.f32.mrf.mxu0
        %v492 = vadd.f32 0.0, %v491
        %v493 = vpop.f32.mrf.mxu0
        %v494 = vadd.f32 0.0, %v493
        %495 = vmatmul.bf16.gmra.mxu0 %v480
        %v496 = vpop.f32.mrf.mxu0
        %v497 = vadd.f32 0.0, %v496
        %v498 = vpop.f32.mrf.mxu0
        %v499 = vadd.f32 0.0, %v498
        %500 = vdwg.mxu0
        %v501 = vmax.f32 %v492, 0.0
        %v502 = vmax.f32 %v494, 0.0
        %v503 = vmax.f32 %v497, 0.0
        %v504 = vmax.f32 %v499, 0.0
        %v505 = vmul.u32 %v281, 4
        %vm506 = vcmp.ge.s32.totalorder %v298, %v505
        %v507 = vmul.u32 %v299, 4
        %vm508 = vcmp.lt.s32.totalorder %v298, %v507
        %vm509 = vmand %vm506, %vm508
        %v510 = vsel %vm509, 1, 0
        %v511 = vcvt.s32.f32 %v510
        %v512 = vmul.u32 %v298, 4
        %vm513 = vcmp.ge.s32.totalorder %v281, %v512
        %vm514 = vcmp.ge.s32.totalorder %v282, %v512
        %vm515 = vcmp.ge.s32.totalorder %v283, %v512
        %vm516 = vcmp.ge.s32.totalorder %v284, %v512
        %v517 = vmul.u32 %v363, 4
        %vm518 = vcmp.lt.s32.totalorder %v281, %v517
        %vm519 = vcmp.lt.s32.totalorder %v282, %v517
        %vm520 = vcmp.lt.s32.totalorder %v283, %v517
        %vm521 = vcmp.lt.s32.totalorder %v284, %v517
        %vm522 = vmand %vm513, %vm518
        %vm523 = vmand %vm514, %vm519
        %vm524 = vmand %vm515, %vm520
        %vm525 = vmand %vm516, %vm521
        %v526 = vsel %vm522, 1, 0
        %v527 = vsel %vm523, 1, 0
        %v528 = vsel %vm524, 1, 0
        %v529 = vsel %vm525, 1, 0
        %v530 = vcvt.s32.f32 %v526
        %v531 = vcvt.s32.f32 %v527
        %v532 = vcvt.s32.f32 %v528
        %v533 = vcvt.s32.f32 %v529
        %vm534 = vcmask 261120
        %v536 = vsel %vm534, %v511, 0
        %538 = vmatpush.msra.mxu0 0.0
        %539 = vmatpush.msra.mxu0 0.0
        %540 = vmatpush.msra.mxu0 0.0
        %541 = vmatpush.msra.mxu0 0.0
        %542 = vmatpush.msra.mxu0 0.0
        %543 = vmatpush.msra.mxu0 0.0
        %544 = vmatpush.msra.mxu0 0.0
        %545 = vmatpush.msra.mxu0 0.0
        %546 = vmatpush.msra.mxu0 0.0
        %547 = vmatpush.msra.mxu0 0.0
        %548 = vmatpush.msra.mxu0 0.0
        %549 = vmatpush.msra.mxu0 0.0
        %550 = vmatpush.msra.mxu0 %v504
        %551 = vmatpush.msra.mxu0 %v503
        %552 = vmatpush.msra.mxu0 %v502
        %553 = vmatpush.msra.mxu0 %v501
        %554 = vmatmul.f32.gmra.mxu0 %v536
        %v555 = vpop.f32.mrf.mxu0
        %v556 = vadd.f32 0.0, %v555
        %557 = vdwg.mxu0
        %558 = vadd.xlane.f32.xlu0 %v556
        %v559 = vpop.xlane.xlu0 %558
        %v560 = vmul.f32 %v501, %v501
        %v561 = vmul.f32 %v502, %v502
        %v562 = vmul.f32 %v503, %v503
        %v563 = vmul.f32 %v504, %v504
        %564 = vmatpush.msra.mxu0 0.0
        %565 = vmatpush.msra.mxu0 0.0
        %566 = vmatpush.msra.mxu0 0.0
        %567 = vmatpush.msra.mxu0 0.0
        %568 = vmatpush.msra.mxu0 0.0
        %569 = vmatpush.msra.mxu0 0.0
        %570 = vmatpush.msra.mxu0 0.0
        %571 = vmatpush.msra.mxu0 0.0
        %572 = vmatpush.msra.mxu0 0.0
        %573 = vmatpush.msra.mxu0 0.0
        %574 = vmatpush.msra.mxu0 0.0
        %575 = vmatpush.msra.mxu0 0.0
        %576 = vmatpush.msra.mxu0 %v563
        %577 = vmatpush.msra.mxu0 %v562
        %578 = vmatpush.msra.mxu0 %v561
        %579 = vmatpush.msra.mxu0 %v560
        %580 = vmatmul.f32.gmra.mxu0 %v536
        %v581 = vpop.f32.mrf.mxu0
        %v582 = vadd.f32 0.0, %v581
        %583 = vdwg.mxu0
        %584 = vadd.xlane.f32.xlu0 %v582
        %v585 = vpop.xlane.xlu0 %584
        %v586 = vrcp.pop 512.0
        %v587 = vmul.f32 512.0, %v586
        %v588 = vsub.f32 1.0, %v587
        %v589 = vmul.f32 %v586, %v588
        %v590 = vadd.f32 %v586, %v589
        %vm591 = vweird.f32 %v586
        %v592 = vsel %vm591, %v586, %v590
        %v593 = vmul.f32 %v559, %v592
        %v594 = vmul.f32 %v585, %v592
        %v595 = vmul.f32 %v593, %v593
        %v596 = vsub.f32 %v594, %v595
        %v597 = vmax.f32 %v596, 0.0
        %v598 = vadd.f32 %v597, 1e-05
        %v599 = vrsqrt.pop %v598
        %v600 = vmul.f32 %v599, %v598
        %v601 = vmul.f32 %v600, %v599
        %v602 = vmul.f32 0.5, %v601
        %v603 = vsub.f32 1.5, %v602
        %v604 = vmul.f32 %v599, %v603
        %vm605 = vweird.f32 %v598
        %vm606 = vweird.f32 %v599
        %vm607 = vmor %vm605, %vm606
        %v608 = vsel %vm607, %v599, %v604
        %vm609 = vcmask 64512
        %v611 = vsel %vm609, %v530, 0
        %v614 = vsel %vm609, %v531, 0
        %v617 = vsel %vm609, %v532, 0
        %v620 = vsel %vm609, %v533, 0
        %622 = vmatpush.msra.mxu0 0.0
        %623 = vmatpush.msra.mxu0 0.0
        %624 = vmatpush.msra.mxu0 0.0
        %625 = vmatpush.msra.mxu0 0.0
        %626 = vmatpush.msra.mxu0 0.0
        %627 = vmatpush.msra.mxu0 0.0
        %628 = vmatpush.msra.mxu0 0.0
        %629 = vmatpush.msra.mxu0 0.0
        %630 = vmatpush.msra.mxu0 0.0
        %631 = vmatpush.msra.mxu0 0.0
        %632 = vmatpush.msra.mxu0 0.0
        %633 = vmatpush.msra.mxu0 0.0
        %634 = vmatpush.msra.mxu0 0.0
        %635 = vmatpush.msra.mxu0 0.0
        %636 = vmatpush.msra.mxu0 0.0
        %637 = vmatpush.msra.mxu0 %v593
        %638 = vmatmul.f32.gmra.mxu0 %v611
        %v639 = vpop.f32.mrf.mxu0
        %v640 = vadd.f32 0.0, %v639
        %641 = vmatmul.f32.gmra.mxu0 %v614
        %v642 = vpop.f32.mrf.mxu0
        %v643 = vadd.f32 0.0, %v642
        %644 = vmatmul.f32.gmra.mxu0 %v617
        %v645 = vpop.f32.mrf.mxu0
        %v646 = vadd.f32 0.0, %v645
        %647 = vmatmul.f32.gmra.mxu0 %v620
        %v648 = vpop.f32.mrf.mxu0
        %v649 = vadd.f32 0.0, %v648
        %650 = vdwg.mxu0
        %651 = vmatpush.msra.mxu0 0.0
        %652 = vmatpush.msra.mxu0 0.0
        %653 = vmatpush.msra.mxu0 0.0
        %654 = vmatpush.msra.mxu0 0.0
        %655 = vmatpush.msra.mxu0 0.0
        %656 = vmatpush.msra.mxu0 0.0
        %657 = vmatpush.msra.mxu0 0.0
        %658 = vmatpush.msra.mxu0 0.0
        %659 = vmatpush.msra.mxu0 0.0
        %660 = vmatpush.msra.mxu0 0.0
        %661 = vmatpush.msra.mxu0 0.0
        %662 = vmatpush.msra.mxu0 0.0
        %663 = vmatpush.msra.mxu0 0.0
        %664 = vmatpush.msra.mxu0 0.0
        %665 = vmatpush.msra.mxu0 0.0
        %666 = vmatpush.msra.mxu0 %v608
        %667 = vmatmul.f32.gmra.mxu0 %v611
        %v668 = vpop.f32.mrf.mxu0
        %v669 = vadd.f32 0.0, %v668
        %670 = vmatmul.f32.gmra.mxu0 %v614
        %v671 = vpop.f32.mrf.mxu0
        %v672 = vadd.f32 0.0, %v671
        %673 = vmatmul.f32.gmra.mxu0 %v617
        %v674 = vpop.f32.mrf.mxu0
        %v675 = vadd.f32 0.0, %v674
        %676 = vmatmul.f32.gmra.mxu0 %v620
        %v677 = vpop.f32.mrf.mxu0
        %v678 = vadd.f32 0.0, %v677
        %679 = vdwg.mxu0
        %v680 = vsub.f32 %v501, %v640
        %v681 = vsub.f32 %v502, %v643
        %v682 = vsub.f32 %v503, %v646
        %v683 = vsub.f32 %v504, %v649
        %v684 = vmul.f32 %v680, %v669
        %v685 = vmul.f32 %v681, %v672
        %v686 = vmul.f32 %v682, %v675
        %v687 = vmul.f32 %v683, %v678
        %v688 = vld [vmem:[%s2] sm:$0xff]
        %v689 = vld [vmem:[%s2 + $0x8] sm:$0xff]
        %v690 = vld [vmem:[%s2 + $0x10] sm:$0xff]
        %v691 = vld [vmem:[%s2 + $0x18] sm:$0xff]
        %693 = vset.pattern.permute.xlu0 0
        %694 = vperm.xlu0 %693, %v688
        %v695 = vpop.permute.xlu0 %694
        %698 = vset.pattern.permute.xlu0 0
        %699 = vperm.xlu0 %698, %v689
        %v700 = vpop.permute.xlu0 %699
        %703 = vset.pattern.permute.xlu0 0
        %704 = vperm.xlu0 %703, %v690
        %v705 = vpop.permute.xlu0 %704
        %708 = vset.pattern.permute.xlu0 0
        %709 = vperm.xlu0 %708, %v691
        %v710 = vpop.permute.xlu0 %709
        %v712 = vmul.f32 %v684, %v695
        %v713 = vmul.f32 %v685, %v700
        %v714 = vmul.f32 %v686, %v705
        %v715 = vmul.f32 %v687, %v710
        %v716 = vld [vmem:[%s3] sm:$0xff]
        %v717 = vld [vmem:[%s3 + $0x8] sm:$0xff]
        %v718 = vld [vmem:[%s3 + $0x10] sm:$0xff]
        %v719 = vld [vmem:[%s3 + $0x18] sm:$0xff]
        %721 = vset.pattern.permute.xlu0 0
        %722 = vperm.xlu0 %721, %v716
        %v723 = vpop.permute.xlu0 %722
        %726 = vset.pattern.permute.xlu0 0
        %727 = vperm.xlu0 %726, %v717
        %v728 = vpop.permute.xlu0 %727
        %731 = vset.pattern.permute.xlu0 0
        %732 = vperm.xlu0 %731, %v718
        %v733 = vpop.permute.xlu0 %732
        %736 = vset.pattern.permute.xlu0 0
        %737 = vperm.xlu0 %736, %v719
        %v738 = vpop.permute.xlu0 %737
        %v740 = vadd.f32 %v712, %v723
        %v741 = vadd.f32 %v713, %v728
        %v742 = vadd.f32 %v714, %v733
        %v743 = vadd.f32 %v715, %v738
        %744 = vmatpush.msra.mxu0 %v362
        %745 = vmatpush.msra.mxu0 %v361
        %746 = vmatpush.msra.mxu0 %v360
        %747 = vmatpush.msra.mxu0 %v359
        %748 = vmatpush.msra.mxu0 %v358
        %749 = vmatpush.msra.mxu0 %v357
        %750 = vmatpush.msra.mxu0 %v356
        %751 = vmatpush.msra.mxu0 %v355
        %752 = vmatpush.msra.mxu0 %v354
        %753 = vmatpush.msra.mxu0 %v353
        %754 = vmatpush.msra.mxu0 %v352
        %755 = vmatpush.msra.mxu0 %v351
        %756 = vmatpush.msra.mxu0 %v350
        %757 = vmatpush.msra.mxu0 %v349
        %758 = vmatpush.msra.mxu0 %v348
        %759 = vmatpush.msra.mxu0 %v347
        %760 = vmatmul.f32.gmra.mxu0 %v740
        %v761 = vpop.f32.mrf.mxu0
        %v762 = vadd.f32 0.0, %v761
        %763 = vmatmul.f32.gmra.mxu0 %v741
        %v764 = vpop.f32.mrf.mxu0
        %v765 = vadd.f32 0.0, %v764
        %766 = vmatmul.f32.gmra.mxu0 %v742
        %v767 = vpop.f32.mrf.mxu0
        %v768 = vadd.f32 0.0, %v767
        %769 = vmatmul.f32.gmra.mxu0 %v743
        %v770 = vpop.f32.mrf.mxu0
        %v771 = vadd.f32 0.0, %v770
        %772 = vdwg.mxu0
        %773 = vmatpush.msra.mxu0 %v411
        %774 = vmatpush.msra.mxu0 %v410
        %775 = vmatpush.msra.mxu0 %v409
        %776 = vmatpush.msra.mxu0 %v408
        %777 = vmatpush.msra.mxu0 %v407
        %778 = vmatpush.msra.mxu0 %v406
        %779 = vmatpush.msra.mxu0 %v405
        %780 = vmatpush.msra.mxu0 %v404
        %781 = vmatpush.msra.mxu0 %v403
        %782 = vmatpush.msra.mxu0 %v402
        %783 = vmatpush.msra.mxu0 %v401
        %784 = vmatpush.msra.mxu0 %v400
        %785 = vmatpush.msra.mxu0 %v399
        %786 = vmatpush.msra.mxu0 %v398
        %787 = vmatpush.msra.mxu0 %v397
        %788 = vmatpush.msra.mxu0 %v396
        %789 = vmatmul.f32.gmra.mxu0 %v740
        %v790 = vpop.f32.mrf.mxu0
        %v791 = vadd.f32 0.0, %v790
        %792 = vmatmul.f32.gmra.mxu0 %v741
        %v793 = vpop.f32.mrf.mxu0
        %v794 = vadd.f32 0.0, %v793
        %795 = vmatmul.f32.gmra.mxu0 %v742
        %v796 = vpop.f32.mrf.mxu0
        %v797 = vadd.f32 0.0, %v796
        %798 = vmatmul.f32.gmra.mxu0 %v743
        %v799 = vpop.f32.mrf.mxu0
        %v800 = vadd.f32 0.0, %v799
        %801 = vdwg.mxu0
        %v802 = vpack.c.bf16 %v765, %v762
        %v803 = vpack.c.bf16 %v771, %v768
        %v804 = vpack.c.bf16 %v741, %v740
        %v805 = vpack.c.bf16 %v743, %v742
        %v806 = vpack.c.bf16 %v794, %v791
        %v807 = vpack.c.bf16 %v800, %v797
        %v808 = vld [vmem:[%s4] sm:$0xf]
        %v809 = vld [vmem:[%s4 + $0x4] sm:$0xf]
        %v812 = vunpack.c.l.b16 %v808
        %v813 = vunpack.c.l.b16 %v809
        %v814 = vpack.c.b16 %v813, %v812
        %vm815 = vcmask 785408
        %v817 = vsel %vm815, %v814, 0
        %819 = vmatpush.bf16.msra.mxu0 0
        %820 = vmatpush.bf16.msra.mxu0 0
        %821 = vmatpush.bf16.msra.mxu0 %v807
        %822 = vmatpush.bf16.msra.mxu0 %v806
        %823 = vmatpush.bf16.msra.mxu0 %v805
        %824 = vmatpush.bf16.msra.mxu0 %v804
        %825 = vmatpush.bf16.msra.mxu0 %v803
        %826 = vmatpush.bf16.msra.mxu0 %v802
        %827 = vmatmul.bf16.gmra.mxu0 %v817
        %v828 = vpop.f32.mrf.mxu0
        %v829 = vadd.f32 0.0, %v828
        %v830 = vpop.f32.mrf.mxu0
        %v831 = vadd.f32 0.0, %v830
        %832 = vdwg.mxu0
        %v833 = vmax.f32 %v829, 0.0
        %v834 = vmax.f32 %v831, 0.0
        %v835 = vmul.u32 %v281, 2
        %vm836 = vcmp.ge.s32.totalorder %v298, %v835
        %v837 = vmul.u32 %v299, 2
        %vm838 = vcmp.lt.s32.totalorder %v298, %v837
        %vm839 = vmand %vm836, %vm838
        %v840 = vsel %vm839, 1, 0
        %v841 = vcvt.s32.f32 %v840
        %v842 = vmul.u32 %v298, 2
        %vm843 = vcmp.ge.s32.totalorder %v281, %v842
        %vm844 = vcmp.ge.s32.totalorder %v282, %v842
        %v845 = vmul.u32 %v363, 2
        %vm846 = vcmp.lt.s32.totalorder %v281, %v845
        %vm847 = vcmp.lt.s32.totalorder %v282, %v845
        %vm848 = vmand %vm843, %vm846
        %vm849 = vmand %vm844, %vm847
        %v850 = vsel %vm848, 1, 0
        %v851 = vsel %vm849, 1, 0
        %v852 = vcvt.s32.f32 %v850
        %v853 = vcvt.s32.f32 %v851
        %vm854 = vcmask 130048
        %v856 = vsel %vm854, %v841, 0
        %858 = vmatpush.msra.mxu0 0.0
        %859 = vmatpush.msra.mxu0 0.0
        %860 = vmatpush.msra.mxu0 0.0
        %861 = vmatpush.msra.mxu0 0.0
        %862 = vmatpush.msra.mxu0 0.0
        %863 = vmatpush.msra.mxu0 0.0
        %864 = vmatpush.msra.mxu0 0.0
        %865 = vmatpush.msra.mxu0 0.0
        %866 = vmatpush.msra.mxu0 0.0
        %867 = vmatpush.msra.mxu0 0.0
        %868 = vmatpush.msra.mxu0 0.0
        %869 = vmatpush.msra.mxu0 0.0
        %870 = vmatpush.msra.mxu0 0.0
        %871 = vmatpush.msra.mxu0 0.0
        %872 = vmatpush.msra.mxu0 %v834
        %873 = vmatpush.msra.mxu0 %v833
        %874 = vmatmul.f32.gmra.mxu0 %v856
        %v875 = vpop.f32.mrf.mxu0
        %v876 = vadd.f32 0.0, %v875
        %877 = vdwg.mxu0
        %878 = vadd.xlane.f32.xlu0 %v876
        %v879 = vpop.xlane.xlu0 %878
        %v880 = vmul.f32 %v833, %v833
        %v881 = vmul.f32 %v834, %v834
        %882 = vmatpush.msra.mxu0 0.0
        %883 = vmatpush.msra.mxu0 0.0
        %884 = vmatpush.msra.mxu0 0.0
        %885 = vmatpush.msra.mxu0 0.0
        %886 = vmatpush.msra.mxu0 0.0
        %887 = vmatpush.msra.mxu0 0.0
        %888 = vmatpush.msra.mxu0 0.0
        %889 = vmatpush.msra.mxu0 0.0
        %890 = vmatpush.msra.mxu0 0.0
        %891 = vmatpush.msra.mxu0 0.0
        %892 = vmatpush.msra.mxu0 0.0
        %893 = vmatpush.msra.mxu0 0.0
        %894 = vmatpush.msra.mxu0 0.0
        %895 = vmatpush.msra.mxu0 0.0
        %896 = vmatpush.msra.mxu0 %v881
        %897 = vmatpush.msra.mxu0 %v880
        %898 = vmatmul.f32.gmra.mxu0 %v856
        %v899 = vpop.f32.mrf.mxu0
        %v900 = vadd.f32 0.0, %v899
        %901 = vdwg.mxu0
        %902 = vadd.xlane.f32.xlu0 %v900
        %v903 = vpop.xlane.xlu0 %902
        %v904 = vrcp.pop 256.0
        %v905 = vmul.f32 256.0, %v904
        %v906 = vsub.f32 1.0, %v905
        %v907 = vmul.f32 %v904, %v906
        %v908 = vadd.f32 %v904, %v907
        %vm909 = vweird.f32 %v904
        %v910 = vsel %vm909, %v904, %v908
        %v911 = vmul.f32 %v879, %v910
        %v912 = vmul.f32 %v903, %v910
        %v913 = vmul.f32 %v911, %v911
        %v914 = vsub.f32 %v912, %v913
        %v915 = vmax.f32 %v914, 0.0
        %v916 = vadd.f32 %v915, 1e-05
        %v917 = vrsqrt.pop %v916
        %v918 = vmul.f32 %v917, %v916
        %v919 = vmul.f32 %v918, %v917
        %v920 = vmul.f32 0.5, %v919
        %v921 = vsub.f32 1.5, %v920
        %v922 = vmul.f32 %v917, %v921
        %vm923 = vweird.f32 %v916
        %vm924 = vweird.f32 %v917
        %vm925 = vmor %vm923, %vm924
        %v926 = vsel %vm925, %v917, %v922
        %v928 = vsel %vm609, %v852, 0
        %v931 = vsel %vm609, %v853, 0
        %933 = vmatpush.msra.mxu0 0.0
        %934 = vmatpush.msra.mxu0 0.0
        %935 = vmatpush.msra.mxu0 0.0
        %936 = vmatpush.msra.mxu0 0.0
        %937 = vmatpush.msra.mxu0 0.0
        %938 = vmatpush.msra.mxu0 0.0
        %939 = vmatpush.msra.mxu0 0.0
        %940 = vmatpush.msra.mxu0 0.0
        %941 = vmatpush.msra.mxu0 0.0
        %942 = vmatpush.msra.mxu0 0.0
        %943 = vmatpush.msra.mxu0 0.0
        %944 = vmatpush.msra.mxu0 0.0
        %945 = vmatpush.msra.mxu0 0.0
        %946 = vmatpush.msra.mxu0 0.0
        %947 = vmatpush.msra.mxu0 0.0
        %948 = vmatpush.msra.mxu0 %v911
        %949 = vmatmul.f32.gmra.mxu0 %v928
        %v950 = vpop.f32.mrf.mxu0
        %v951 = vadd.f32 0.0, %v950
        %952 = vmatmul.f32.gmra.mxu0 %v931
        %v953 = vpop.f32.mrf.mxu0
        %v954 = vadd.f32 0.0, %v953
        %955 = vdwg.mxu0
        %956 = vmatpush.msra.mxu0 0.0
        %957 = vmatpush.msra.mxu0 0.0
        %958 = vmatpush.msra.mxu0 0.0
        %959 = vmatpush.msra.mxu0 0.0
        %960 = vmatpush.msra.mxu0 0.0
        %961 = vmatpush.msra.mxu0 0.0
        %962 = vmatpush.msra.mxu0 0.0
        %963 = vmatpush.msra.mxu0 0.0
        %964 = vmatpush.msra.mxu0 0.0
        %965 = vmatpush.msra.mxu0 0.0
        %966 = vmatpush.msra.mxu0 0.0
        %967 = vmatpush.msra.mxu0 0.0
        %968 = vmatpush.msra.mxu0 0.0
        %969 = vmatpush.msra.mxu0 0.0
        %970 = vmatpush.msra.mxu0 0.0
        %971 = vmatpush.msra.mxu0 %v926
        %972 = vmatmul.f32.gmra.mxu0 %v928
        %v973 = vpop.f32.mrf.mxu0
        %v974 = vadd.f32 0.0, %v973
        %975 = vmatmul.f32.gmra.mxu0 %v931
        %v976 = vpop.f32.mrf.mxu0
        %v977 = vadd.f32 0.0, %v976
        %978 = vdwg.mxu0
        %v979 = vsub.f32 %v833, %v951
        %v980 = vsub.f32 %v834, %v954
        %v981 = vmul.f32 %v979, %v974
        %v982 = vmul.f32 %v980, %v977
        %v983 = vld [vmem:[%s5] sm:$0xff]
        %v984 = vld [vmem:[%s5 + $0x8] sm:$0xff]
        %986 = vset.pattern.permute.xlu0 0
        %987 = vperm.xlu0 %986, %v983
        %v988 = vpop.permute.xlu0 %987
        %991 = vset.pattern.permute.xlu0 0
        %992 = vperm.xlu0 %991, %v984
        %v993 = vpop.permute.xlu0 %992
        %v995 = vmul.f32 %v981, %v988
        %v996 = vmul.f32 %v982, %v993
        %v997 = vld [vmem:[%s6] sm:$0xff]
        %v998 = vld [vmem:[%s6 + $0x8] sm:$0xff]
        %1000 = vset.pattern.permute.xlu0 0
        %1001 = vperm.xlu0 %1000, %v997
        %v1002 = vpop.permute.xlu0 %1001
        %1005 = vset.pattern.permute.xlu0 0
        %1006 = vperm.xlu0 %1005, %v998
        %v1007 = vpop.permute.xlu0 %1006
        %v1009 = vadd.f32 %v995, %v1002
        %v1010 = vadd.f32 %v996, %v1007
        %v1011 = vadd.f32 %v1009, %v278
        %v1012 = vadd.f32 %v1010, %v279
        %1013 = vst [vmem:[%s271] sm:$0xff] %v1011
        %1014 = vst [vmem:[%s271 + $0x8] sm:$0xff] %v1012
        %s1015 = sand.u32 %s181, 1
        %s1016 = scalar_lea.sflag [#allocation3], %s1015
        %s1017 = sand.u32 %s181, 1
        %s1018 = smul.addr %s1017, 16
        %s1019 = scalar_lea.vmem [#allocation2], %s1018
        // Predicated region
        $region49: #{tpu_custom_call.1} parent=47 // pred_check
          %p1020 = pneg %p191
        $region50: #{tpu_custom_call.1} parent=47 // pred_check_branch
          %1022 = sbr.rel (%p1020) target = $region52
        $region51: #{tpu_custom_call.1} parent=47 // pred_region
          %1024 = vsyncadd %s1016, 0
          %s1025 = smul.addr %s21, 2
          %s1026 = smul.addr %s1025, 8
          %s1027 = scalar_lea.hbm %s7, %s1026
          %s1028 = sshll.u32 %s1019, 4
          %s1029 = int_to_ptr.vmem [resolvable:$true] %s1028
          %s1030 = sshll.u32 %s1027, 4
          %s1031 = int_to_ptr.hbm [resolvable:$true] %s1030
          %1036 = dma.vmem_to_hbm [thread:$0]  %s1029, 256, %s1031, %s1016, 128, 128, 8
        $region52: #{tpu_custom_call.1} parent=47 // pred_fallthru
          _
      $region48: #{tpu_custom_call.1} parent=5 // pred_fallthru
        _
      %p1037 = scmp.le.s32.totalorder 2, %s16
      // Predicated region
      $region53: #{tpu_custom_call.1} parent=5 // pred_check
        %p1038 = pneg %p1037
      $region54: #{tpu_custom_call.1} parent=5 // pred_check_branch
        %1040 = sbr.rel (%p1038) target = $region56
      $region55: #{tpu_custom_call.1} parent=5 // pred_region
        %s1041 = ssub.s32 %s16, 2
        // Predicated region
        $region57: #{tpu_custom_call.1} parent=55 // pred_check
          %p1042 = pneg %p197
        $region58: #{tpu_custom_call.1} parent=55 // pred_check_branch
          %1044 = sbr.rel (%p1042) target = $region60
        $region59: #{tpu_custom_call.1} parent=55 // pred_region
          %s1045 = sand.u32 %s182, 1
          %s1046 = scalar_lea.sflag [#allocation3], %s1045
          %s1047 = sand.u32 %s182, 1
          %s1048 = smul.addr %s1047, 16
          %s1049 = scalar_lea.vmem [#allocation2], %s1048
          %1051 = dma.done %s1046, 256
        $region60: #{tpu_custom_call.1} parent=55 // pred_fallthru
          _
      $region56: #{tpu_custom_call.1} parent=5 // pred_fallthru
        _
    $region6: #{tpu_custom_call.1} parent=1 // loop_footer
      %s20 = sadd.s32 1, %s16
    $region7: #{tpu_custom_call.1} parent=1 // loop_footer_branch
      %15 = sbr.rel target = $region3
    $region8: #{tpu_custom_call.1} parent=1 // loop_exit
      _
    %1052 = vsyncpa [#allocation3], 1
    %s1053 = scalar_lea.sflag [#allocation3], 1
    %1054 = vsyncpa %s1053, 1

</llo_original>
